<compile_context>
chip_gen: v7x
topology: tpu7x:2x2x1
jax: 0.10.0
libtpu: 0.0.40
codegen_flags: <defaults>
</compile_context>

<pallas_src>
import jax
import jax.numpy as jnp
from jax import lax
from jax.experimental import pallas as pl
from jax.experimental.pallas import tpu as pltpu
import numpy as np

# ---- static model dims (from the module __init__) ----
C_IN1, C_OUT1, K1, D1, T_IN1, T_OUT1 = 16, 8, 3, 1, 15, 13
C_IN2, C_OUT2, K2, D2, T_IN2, T_OUT2 = 8, 3, 3, 2, 13, 9
FLAT, N_OUT = 27, 3

FEAT1 = C_IN1 * T_IN1     # 240  (NCW-flattened input)
FEAT2 = C_OUT1 * T_OUT1   # 104  (NCW-flattened tdnn1 output)
FEAT3 = C_OUT2 * T_OUT2   # 27   (NCW-flattened tdnn2 output == torch flatten)

_MAX_BATCH_TILE = 4096    # multiple of 8; ~2 MiB bf16 input tile, fits all gens


def _sigmoid_f32(x):
    # exp and approx-reciprocal both ride the EUP slot; no VPU divide.
    return pl.reciprocal(1.0 + jnp.exp(-x), approx=True)


def tdnn_kernel(x_ref, w1_ref, b1_ref, w2_ref, b2_ref, wl_ref, bl_ref, out_ref):
    # x_ref : (Bt, 240) bf16   NCW-flattened input tile
    # w1_ref: (240, 104) bf16  block-Toeplitz conv1 weight
    # b1_ref: (1, 104) f32
    # w2_ref: (104, 27) bf16   block-Toeplitz conv2 weight
    # b2_ref: (1, 27) f32
    # wl_ref: (27, 3) bf16     linear weight (transposed)
    # bl_ref: (1, 3) f32
    # out_ref: (Bt, 3) f32
    x = x_ref[...]

    # --- tdnn1 + sigmoid ---
    y1 = jnp.dot(x, w1_ref[...], preferred_element_type=jnp.float32) + b1_ref[...]
    h1 = _sigmoid_f32(y1)                                   # (Bt, 104) f32

    # --- tdnn2 + sigmoid ---
    y2 = jnp.dot(h1.astype(jnp.bfloat16), w2_ref[...],
                 preferred_element_type=jnp.float32) + b2_ref[...]
    h2 = _sigmoid_f32(y2)                                   # (Bt, 27) f32

    # --- flatten (already NCW order) + linear ---
    out = jnp.dot(h2.astype(jnp.bfloat16), wl_ref[...],
                  preferred_element_type=jnp.float32) + bl_ref[...]
    out_ref[...] = out.astype(out_ref.dtype)


def _conv1d_toeplitz(w, t_in, t_out, dilation):
    """PyTorch Conv1d weight (C_out, C_in, K) -> dense (C_in*t_in, C_out*t_out)
    matrix acting on NCW-flattened input and producing NCW-flattened output."""
    c_out, c_in, k_taps = w.shape
    mat = jnp.zeros((c_in, t_in, c_out, t_out), jnp.float32)
    for k in range(k_taps):
        # shift[s, t] = 1  iff  s == t + k*dilation  (VALID dilated conv tap)
        shift = jnp.eye(t_in, t_out, k=-k * dilation, dtype=jnp.float32)
        mat = mat + jnp.einsum('oc,st->csot', w[:, :, k].astype(jnp.float32), shift)
    return mat.reshape(c_in * t_in, c_out * t_out)


def tdnn_v1_forward(x_ncw, w1, b1, w2, b2, wl, bl, *, batch_tile=None):
    """x_ncw: (B, 16, 15) float32; params in PyTorch shapes:
       w1 (8,16,3), b1 (8,), w2 (3,8,3), b2 (3,), wl (3,27), bl (3,)."""
    B = x_ncw.shape[0]
    if batch_tile is None:
        batch_tile = B if B <= _MAX_BATCH_TILE else _MAX_BATCH_TILE
    grid = (pl.cdiv(B, batch_tile),)

    # ---- wrapper-side weight packing (tiny, done once) ----
    # x is consumed in its native NCW flatten order -> no transpose pass.
    # Ideally the caller already provides bf16 activations; the cast here is
    # the only extra pass over x.
    x_flat = x_ncw.reshape(B, FEAT1).astype(jnp.bfloat16)             # (B, 240)
    w1_big = _conv1d_toeplitz(w1, T_IN1, T_OUT1, D1).astype(jnp.bfloat16)  # (240, 104)
    w2_big = _conv1d_toeplitz(w2, T_IN2, T_OUT2, D2).astype(jnp.bfloat16)  # (104, 27)
    wl_t = jnp.transpose(wl).astype(jnp.bfloat16)                     # (27, 3)
    b1_row = jnp.repeat(b1, T_OUT1).reshape(1, FEAT2).astype(jnp.float32)  # (1, 104)
    b2_row = jnp.repeat(b2, T_OUT2).reshape(1, FEAT3).astype(jnp.float32)  # (1, 27)
    bl_row = bl.reshape(1, N_OUT).astype(jnp.float32)                 # (1, 3)

    cost = pl.CostEstimate(
        flops=2 * B * (FEAT1 * FEAT2 + FEAT2 * FEAT3 + FEAT3 * N_OUT),
        transcendentals=2 * B * (FEAT2 + FEAT3),
        bytes_accessed=(B * FEAT1 * 2 + B * N_OUT * 4
                        + (FEAT1 * FEAT2 + FEAT2 * FEAT3 + FEAT3 * N_OUT) * 2
                        + (FEAT2 + FEAT3 + N_OUT) * 4),
    )

    return pl.pallas_call(
        tdnn_kernel,
        out_shape=jax.ShapeDtypeStruct((B, N_OUT), jnp.float32),
        grid_spec=pltpu.PrefetchScalarGridSpec(
            num_scalar_prefetch=0,
            grid=grid,
            in_specs=[
                pl.BlockSpec((batch_tile, FEAT1), lambda i: (i, 0)),  # x tile
                pl.BlockSpec((FEAT1, FEAT2), lambda i: (0, 0)),       # W1 (resident)
                pl.BlockSpec((1, FEAT2), lambda i: (0, 0)),           # b1
                pl.BlockSpec((FEAT2, FEAT3), lambda i: (0, 0)),       # W2
                pl.BlockSpec((1, FEAT3), lambda i: (0, 0)),           # b2
                pl.BlockSpec((FEAT3, N_OUT), lambda i: (0, 0)),       # WL
                pl.BlockSpec((1, N_OUT), lambda i: (0, 0)),           # bl
            ],
            out_specs=pl.BlockSpec((batch_tile, N_OUT), lambda i: (i, 0)),
        ),
        compiler_params=pltpu.CompilerParams(
            dimension_semantics=("parallel",),
            vmem_limit_bytes=32 * 1024 * 1024,
        ),
        cost_estimate=cost,
    )(x_flat, w1_big, b1_row, w2_big, b2_row, wl_t, bl_row)


def ref_forward(x, w1, b1, w2, b2, wl, bl):
    """Pure-JAX f32 reference with PyTorch NCW conv semantics."""
    dn = ('NCH', 'OIH', 'NCH')
    y1 = lax.conv_general_dilated(x, w1, (1,), 'VALID', dimension_numbers=dn)
    h1 = jax.nn.sigmoid(y1 + b1[None, :, None])
    y2 = lax.conv_general_dilated(h1, w2, (1,), 'VALID', rhs_dilation=(2,),
                                  dimension_numbers=dn)
    h2 = jax.nn.sigmoid(y2 + b2[None, :, None])
    flat = h2.reshape(h2.shape[0], -1)        # torch channel-major flatten
    return flat @ wl.T + bl


if __name__ == "__main__":
    key = jax.random.PRNGKey(0)
    kx, k1, k2, k3, k4, k5, k6 = jax.random.split(key, 7)

    B = 16
    x = jax.random.normal(kx, (B, C_IN1, T_IN1), jnp.float32)      # (16, 16, 15)

    # deterministic synthetic parameters (PyTorch layouts)
    w1 = 0.2 * jax.random.normal(k1, (C_OUT1, C_IN1, K1), jnp.float32)
    b1 = 0.1 * jax.random.normal(k2, (C_OUT1,), jnp.float32)
    w2 = 0.2 * jax.random.normal(k3, (C_OUT2, C_IN2, K2), jnp.float32)
    b2 = 0.1 * jax.random.normal(k4, (C_OUT2,), jnp.float32)
    wl = 0.2 * jax.random.normal(k5, (N_OUT, FLAT), jnp.float32)
    bl = 0.1 * jax.random.normal(k6, (N_OUT,), jnp.float32)

    # batch_tile=8 exercises a multi-block (grid=(2,)) pipelined run.
    out = tdnn_v1_forward(x, w1, b1, w2, b2, wl, bl, batch_tile=8)
    out = jax.block_until_ready(out)

    expected = jax.block_until_ready(ref_forward(x, w1, b1, w2, b2, wl, bl))
    assert out.shape == (B, N_OUT)
    # bf16 matmul inputs (f32 accumulation) -> loosened tolerance vs f32 ref.
    np.testing.assert_allclose(np.asarray(out), np.asarray(expected),
                               rtol=5e-2, atol=3e-2)
    print("KERNEL_OK")
</pallas_src>

<mosaic_0001>
module attributes {stable_mosaic.version = 11 : i64} {
  func.func @tdnn_kernel(%arg0: i32, %arg1: memref<8x240xbf16, #tpu.memory_space<vmem>>, %arg2: memref<240x104xbf16, #tpu.memory_space<vmem>>, %arg3: memref<1x104xf32, #tpu.memory_space<vmem>>, %arg4: memref<104x27xbf16, #tpu.memory_space<vmem>>, %arg5: memref<1x27xf32, #tpu.memory_space<vmem>>, %arg6: memref<27x3xbf16, #tpu.memory_space<vmem>>, %arg7: memref<1x3xf32, #tpu.memory_space<vmem>>, %arg8: memref<8x3xf32, #tpu.memory_space<vmem>>) attributes {dimension_semantics = [#tpu.dimension_semantics<parallel>], iteration_bounds = array<i64: 2>, scalar_prefetch = 0 : i64, scratch_operands = 0 : i64, tpu.core_type = #tpu.core_type<tc>, window_params = [{transform_indices = @transform_0, window_bounds = array<i64: 8, 240>}, {pipeline_mode = #tpu.pipeline_mode<synchronous>, transform_indices = @transform_1, window_bounds = array<i64: 240, 104>}, {pipeline_mode = #tpu.pipeline_mode<synchronous>, transform_indices = @transform_2, window_bounds = array<i64: 1, 104>}, {pipeline_mode = #tpu.pipeline_mode<synchronous>, transform_indices = @transform_3, window_bounds = array<i64: 104, 27>}, {pipeline_mode = #tpu.pipeline_mode<synchronous>, transform_indices = @transform_4, window_bounds = array<i64: 1, 27>}, {pipeline_mode = #tpu.pipeline_mode<synchronous>, transform_indices = @transform_5, window_bounds = array<i64: 27, 3>}, {pipeline_mode = #tpu.pipeline_mode<synchronous>, transform_indices = @transform_6, window_bounds = array<i64: 1, 3>}, {transform_indices = @transform_7, window_bounds = array<i64: 8, 3>}]} {
    %c0 = arith.constant 0 : index
    %c0_0 = arith.constant 0 : index
    %0 = vector.load %arg1[%c0, %c0_0] : memref<8x240xbf16, #tpu.memory_space<vmem>>, vector<8x240xbf16>
    %c0_1 = arith.constant 0 : index
    %c0_2 = arith.constant 0 : index
    %1 = vector.load %arg2[%c0_1, %c0_2] : memref<240x104xbf16, #tpu.memory_space<vmem>>, vector<240x104xbf16>
    %cst = arith.constant dense<0.000000e+00> : vector<8x104xf32>
    %2 = tpu.matmul %0, %1, %cst {dimension_numbers = #tpu.dot_dimension_numbers<[1], [0], [0], [1], [0, 0, 1, 1], [], []>} : vector<8x240xbf16>, vector<240x104xbf16>, vector<8x104xf32> -> vector<8x104xf32>
    %c0_3 = arith.constant 0 : index
    %c0_4 = arith.constant 0 : index
    %3 = vector.load %arg3[%c0_3, %c0_4] : memref<1x104xf32, #tpu.memory_space<vmem>>, vector<1x104xf32>
    %4 = vector.broadcast %3 : vector<1x104xf32> to vector<8x104xf32>
    %5 = arith.addf %2, %4 : vector<8x104xf32>
    %cst_5 = arith.constant 0.000000e+00 : f32
    %6 = vector.broadcast %cst_5 : f32 to vector<8x104xf32>
    %7 = arith.subf %6, %5 : vector<8x104xf32>
    %8 = math.exp %7 : vector<8x104xf32>
    %cst_6 = arith.constant 1.000000e+00 : f32
    %9 = vector.broadcast %cst_6 : f32 to vector<8x104xf32>
    %10 = arith.addf %9, %8 : vector<8x104xf32>
    %11 = tpu.reciprocal %10 {approx = true} : vector<8x104xf32> -> vector<8x104xf32>
    %12 = arith.truncf %11 : vector<8x104xf32> to vector<8x104xbf16>
    %c0_7 = arith.constant 0 : index
    %c0_8 = arith.constant 0 : index
    %13 = vector.load %arg4[%c0_7, %c0_8] : memref<104x27xbf16, #tpu.memory_space<vmem>>, vector<104x27xbf16>
    %cst_9 = arith.constant dense<0.000000e+00> : vector<8x27xf32>
    %14 = tpu.matmul %12, %13, %cst_9 {dimension_numbers = #tpu.dot_dimension_numbers<[1], [0], [0], [1], [0, 0, 1, 1], [], []>} : vector<8x104xbf16>, vector<104x27xbf16>, vector<8x27xf32> -> vector<8x27xf32>
    %c0_10 = arith.constant 0 : index
    %c0_11 = arith.constant 0 : index
    %15 = vector.load %arg5[%c0_10, %c0_11] : memref<1x27xf32, #tpu.memory_space<vmem>>, vector<1x27xf32>
    %16 = vector.broadcast %15 : vector<1x27xf32> to vector<8x27xf32>
    %17 = arith.addf %14, %16 : vector<8x27xf32>
    %cst_12 = arith.constant 0.000000e+00 : f32
    %18 = vector.broadcast %cst_12 : f32 to vector<8x27xf32>
    %19 = arith.subf %18, %17 : vector<8x27xf32>
    %20 = math.exp %19 : vector<8x27xf32>
    %cst_13 = arith.constant 1.000000e+00 : f32
    %21 = vector.broadcast %cst_13 : f32 to vector<8x27xf32>
    %22 = arith.addf %21, %20 : vector<8x27xf32>
    %23 = tpu.reciprocal %22 {approx = true} : vector<8x27xf32> -> vector<8x27xf32>
    %24 = arith.truncf %23 : vector<8x27xf32> to vector<8x27xbf16>
    %c0_14 = arith.constant 0 : index
    %c0_15 = arith.constant 0 : index
    %25 = vector.load %arg6[%c0_14, %c0_15] : memref<27x3xbf16, #tpu.memory_space<vmem>>, vector<27x3xbf16>
    %cst_16 = arith.constant dense<0.000000e+00> : vector<8x3xf32>
    %26 = tpu.matmul %24, %25, %cst_16 {dimension_numbers = #tpu.dot_dimension_numbers<[1], [0], [0], [1], [0, 0, 1, 1], [], []>} : vector<8x27xbf16>, vector<27x3xbf16>, vector<8x3xf32> -> vector<8x3xf32>
    %c0_17 = arith.constant 0 : index
    %c0_18 = arith.constant 0 : index
    %27 = vector.load %arg7[%c0_17, %c0_18] : memref<1x3xf32, #tpu.memory_space<vmem>>, vector<1x3xf32>
    %28 = vector.broadcast %27 : vector<1x3xf32> to vector<8x3xf32>
    %29 = arith.addf %26, %28 : vector<8x3xf32>
    %c0_19 = arith.constant 0 : index
    %c0_20 = arith.constant 0 : index
    %30 = vector.load %arg8[%c0_19, %c0_20] : memref<8x3xf32, #tpu.memory_space<vmem>>, vector<8x3xf32>
    tpu.vector_store %arg8[%c0_19, %c0_20], %29 {strides = array<i32>} : memref<8x3xf32, #tpu.memory_space<vmem>>, vector<8x3xf32>,
    return
  }
  func.func @transform_0(%arg0: i32) -> (i32, i32) {
    %c0_i32 = arith.constant 0 : i32
    %c0_i32_0 = arith.constant 0 : i32
    return %arg0, %c0_i32 : i32, i32
  }
  func.func @transform_1(%arg0: i32) -> (i32, i32) {
    %c0_i32 = arith.constant 0 : i32
    %c0_i32_0 = arith.constant 0 : i32
    %c0_i32_1 = arith.constant 0 : i32
    return %c0_i32, %c0_i32_0 : i32, i32
  }
  func.func @transform_2(%arg0: i32) -> (i32, i32) {
    %c0_i32 = arith.constant 0 : i32
    %c0_i32_0 = arith.constant 0 : i32
    %c0_i32_1 = arith.constant 0 : i32
    return %c0_i32, %c0_i32_0 : i32, i32
  }
  func.func @transform_3(%arg0: i32) -> (i32, i32) {
    %c0_i32 = arith.constant 0 : i32
    %c0_i32_0 = arith.constant 0 : i32
    %c0_i32_1 = arith.constant 0 : i32
    return %c0_i32, %c0_i32_0 : i32, i32
  }
  func.func @transform_4(%arg0: i32) -> (i32, i32) {
    %c0_i32 = arith.constant 0 : i32
    %c0_i32_0 = arith.constant 0 : i32
    %c0_i32_1 = arith.constant 0 : i32
    return %c0_i32, %c0_i32_0 : i32, i32
  }
  func.func @transform_5(%arg0: i32) -> (i32, i32) {
    %c0_i32 = arith.constant 0 : i32
    %c0_i32_0 = arith.constant 0 : i32
    %c0_i32_1 = arith.constant 0 : i32
    return %c0_i32, %c0_i32_0 : i32, i32
  }
  func.func @transform_6(%arg0: i32) -> (i32, i32) {
    %c0_i32 = arith.constant 0 : i32
    %c0_i32_0 = arith.constant 0 : i32
    %c0_i32_1 = arith.constant 0 : i32
    return %c0_i32, %c0_i32_0 : i32, i32
  }
  func.func @transform_7(%arg0: i32) -> (i32, i32) {
    %c0_i32 = arith.constant 0 : i32
    %c0_i32_0 = arith.constant 0 : i32
    return %arg0, %c0_i32 : i32, i32
  }
}

</mosaic_0001>

<llo_original>
// kernel: tpu_custom_call.1
$region0: #{tpu_custom_call.1}
  #allocation0 [shape = 'u32[]', space=smem, size = 0x4, offset = 0x4, fixed_abs, tag = 'smem constant byte address 0x4 - core index']
  #allocation1 [shape = 'u32[144,128]{1,0:T(1,128)}', space=vmem, size = 0x12000, scoped, tag = 'internal scratch']
  %s0 = inlined_call_operand.vmem [shape: bf16[16,240], index: 0, kind: input, shape index: {}]
  %s1 = inlined_call_operand.vmem [shape: bf16[240,104], index: 1, kind: input, shape index: {}]
  %s2 = inlined_call_operand.vmem [shape: f32[1,104], index: 2, kind: input, shape index: {}]
  %s3 = inlined_call_operand.vmem [shape: bf16[104,27], index: 3, kind: input, shape index: {}]
  %s4 = inlined_call_operand.vmem [shape: f32[1,27], index: 4, kind: input, shape index: {}]
  %s5 = inlined_call_operand.vmem [shape: bf16[27,3], index: 5, kind: input, shape index: {}]
  %s6 = inlined_call_operand.vmem [shape: f32[1,3], index: 6, kind: input, shape index: {}]
  %s7 = inlined_call_operand.vmem [shape: f32[16,3], index: 7, kind: output, shape index: {}]
  %s8 = sld [smem:[#allocation0]]
  $region61: #{tpu_custom_call.1} parent=0
    _
  %s10 = ssub.s32 1, %s8
  %s11 = scalar_select 0, %s10, %s8
  loop: start=0, step=1, limit=4
  $region2: #{tpu_custom_call.1} parent=0 // loop_pre_header
    _
  $region3: #{tpu_custom_call.1} parent=0 // loop_header
    %s13 = sphi 0, %s17
    %p14 = scmp.ge.s32.totalorder %s13, 4
    %s23 = sphi 0, %s25
    %s26 = sphi 0, %s23
    %s27 = sphi 0, %s26
    %s43 = sphi 0, %s27
    %s47 = sphi 0, %s47
    %s49 = sphi 0, %s47
    %s50 = sphi 0, %s49
    %s64 = sphi 0, %s50
    %s68 = sphi 0, %s68
    %s70 = sphi 0, %s68
    %s71 = sphi 0, %s70
    %s85 = sphi 0, %s71
    %s89 = sphi 0, %s89
    %s91 = sphi 0, %s89
    %s92 = sphi 0, %s91
    %s106 = sphi 0, %s92
    %s110 = sphi 0, %s110
    %s112 = sphi 0, %s110
    %s113 = sphi 0, %s112
    %s127 = sphi 0, %s113
    %s131 = sphi 0, %s131
    %s133 = sphi 0, %s131
    %s134 = sphi 0, %s133
    %s148 = sphi 0, %s134
    %s152 = sphi 0, %s152
    %s154 = sphi 0, %s152
    %s155 = sphi 0, %s154
    %s169 = sphi 0, %s155
    %s175 = sphi 0, %s177
    %s178 = sphi 0, %s175
    %s179 = sphi 0, %s178
    %s195 = sphi 0, %s179
  $region4: #{tpu_custom_call.1} parent=0 // loop_header_branch
    %16 = sbr.rel (%p14) target = $region8
  $region5: #{tpu_custom_call.1} parent=0 // loop_body
    %s18 = ssub.s32 %s13, 1
    %s19 = ssub.s32 %s13, 2
    %s20 = sadd.s32 %s13, 1
    %s21 = ssub.s32 %s13, %s20
    %p22 = scmp.eq.s32.totalorder %s21, 0
    %s24 = sadd.s32 %s23, 1
    %s25 = scalar_select %p22, %s23, %s24
    %p28 = pneg %p22
    %p29 = scmp.eq.s32.totalorder %s13, 1
    %p30 = por %p28, %p29
    %p31 = scmp.ne.s32.totalorder %s23, %s26
    %p32 = scmp.eq.s32.totalorder %s13, 0
    %p33 = por %p31, %p32
    %p34 = scmp.ne.s32.totalorder %s23, %s26
    %p35 = scmp.eq.s32.totalorder %s18, 1
    %p36 = por %p34, %p35
    %p37 = scmp.ne.s32.totalorder %s26, %s27
    %p38 = scmp.eq.s32.totalorder %s18, 0
    %p39 = por %p37, %p38
    %p40 = scmp.ne.s32.totalorder %s26, %s27
    %p41 = scmp.eq.s32.totalorder %s19, 1
    %p42 = por %p40, %p41
    %p44 = scmp.ne.s32.totalorder %s27, %s43
    %p45 = scmp.eq.s32.totalorder %s19, 0
    %p46 = por %p44, %p45
    %s48 = sadd.s32 %s47, 1
    %p51 = scmp.eq.s32.totalorder %s13, 1
    %p52 = scmp.ne.s32.totalorder %s47, %s49
    %p53 = scmp.eq.s32.totalorder %s13, 0
    %p54 = por %p52, %p53
    %p55 = scmp.ne.s32.totalorder %s47, %s49
    %p56 = scmp.eq.s32.totalorder %s18, 1
    %p57 = por %p55, %p56
    %p58 = scmp.ne.s32.totalorder %s49, %s50
    %p59 = scmp.eq.s32.totalorder %s18, 0
    %p60 = por %p58, %p59
    %p61 = scmp.ne.s32.totalorder %s49, %s50
    %p62 = scmp.eq.s32.totalorder %s19, 1
    %p63 = por %p61, %p62
    %p65 = scmp.ne.s32.totalorder %s50, %s64
    %p66 = scmp.eq.s32.totalorder %s19, 0
    %p67 = por %p65, %p66
    %s69 = sadd.s32 %s68, 1
    %p72 = scmp.eq.s32.totalorder %s13, 1
    %p73 = scmp.ne.s32.totalorder %s68, %s70
    %p74 = scmp.eq.s32.totalorder %s13, 0
    %p75 = por %p73, %p74
    %p76 = scmp.ne.s32.totalorder %s68, %s70
    %p77 = scmp.eq.s32.totalorder %s18, 1
    %p78 = por %p76, %p77
    %p79 = scmp.ne.s32.totalorder %s70, %s71
    %p80 = scmp.eq.s32.totalorder %s18, 0
    %p81 = por %p79, %p80
    %p82 = scmp.ne.s32.totalorder %s70, %s71
    %p83 = scmp.eq.s32.totalorder %s19, 1
    %p84 = por %p82, %p83
    %p86 = scmp.ne.s32.totalorder %s71, %s85
    %p87 = scmp.eq.s32.totalorder %s19, 0
    %p88 = por %p86, %p87
    %s90 = sadd.s32 %s89, 1
    %p93 = scmp.eq.s32.totalorder %s13, 1
    %p94 = scmp.ne.s32.totalorder %s89, %s91
    %p95 = scmp.eq.s32.totalorder %s13, 0
    %p96 = por %p94, %p95
    %p97 = scmp.ne.s32.totalorder %s89, %s91
    %p98 = scmp.eq.s32.totalorder %s18, 1
    %p99 = por %p97, %p98
    %p100 = scmp.ne.s32.totalorder %s91, %s92
    %p101 = scmp.eq.s32.totalorder %s18, 0
    %p102 = por %p100, %p101
    %p103 = scmp.ne.s32.totalorder %s91, %s92
    %p104 = scmp.eq.s32.totalorder %s19, 1
    %p105 = por %p103, %p104
    %p107 = scmp.ne.s32.totalorder %s92, %s106
    %p108 = scmp.eq.s32.totalorder %s19, 0
    %p109 = por %p107, %p108
    %s111 = sadd.s32 %s110, 1
    %p114 = scmp.eq.s32.totalorder %s13, 1
    %p115 = scmp.ne.s32.totalorder %s110, %s112
    %p116 = scmp.eq.s32.totalorder %s13, 0
    %p117 = por %p115, %p116
    %p118 = scmp.ne.s32.totalorder %s110, %s112
    %p119 = scmp.eq.s32.totalorder %s18, 1
    %p120 = por %p118, %p119
    %p121 = scmp.ne.s32.totalorder %s112, %s113
    %p122 = scmp.eq.s32.totalorder %s18, 0
    %p123 = por %p121, %p122
    %p124 = scmp.ne.s32.totalorder %s112, %s113
    %p125 = scmp.eq.s32.totalorder %s19, 1
    %p126 = por %p124, %p125
    %p128 = scmp.ne.s32.totalorder %s113, %s127
    %p129 = scmp.eq.s32.totalorder %s19, 0
    %p130 = por %p128, %p129
    %s132 = sadd.s32 %s131, 1
    %p135 = scmp.eq.s32.totalorder %s13, 1
    %p136 = scmp.ne.s32.totalorder %s131, %s133
    %p137 = scmp.eq.s32.totalorder %s13, 0
    %p138 = por %p136, %p137
    %p139 = scmp.ne.s32.totalorder %s131, %s133
    %p140 = scmp.eq.s32.totalorder %s18, 1
    %p141 = por %p139, %p140
    %p142 = scmp.ne.s32.totalorder %s133, %s134
    %p143 = scmp.eq.s32.totalorder %s18, 0
    %p144 = por %p142, %p143
    %p145 = scmp.ne.s32.totalorder %s133, %s134
    %p146 = scmp.eq.s32.totalorder %s19, 1
    %p147 = por %p145, %p146
    %p149 = scmp.ne.s32.totalorder %s134, %s148
    %p150 = scmp.eq.s32.totalorder %s19, 0
    %p151 = por %p149, %p150
    %s153 = sadd.s32 %s152, 1
    %p156 = scmp.eq.s32.totalorder %s13, 1
    %p157 = scmp.ne.s32.totalorder %s152, %s154
    %p158 = scmp.eq.s32.totalorder %s13, 0
    %p159 = por %p157, %p158
    %p160 = scmp.ne.s32.totalorder %s152, %s154
    %p161 = scmp.eq.s32.totalorder %s18, 1
    %p162 = por %p160, %p161
    %p163 = scmp.ne.s32.totalorder %s154, %s155
    %p164 = scmp.eq.s32.totalorder %s18, 0
    %p165 = por %p163, %p164
    %p166 = scmp.ne.s32.totalorder %s154, %s155
    %p167 = scmp.eq.s32.totalorder %s19, 1
    %p168 = por %p166, %p167
    %p170 = scmp.ne.s32.totalorder %s155, %s169
    %p171 = scmp.eq.s32.totalorder %s19, 0
    %p172 = por %p170, %p171
    %s173 = ssub.s32 %s13, %s20
    %p174 = scmp.eq.s32.totalorder %s173, 0
    %s176 = sadd.s32 %s175, 1
    %s177 = scalar_select %p174, %s175, %s176
    %p180 = pneg %p174
    %p181 = scmp.eq.s32.totalorder %s13, 1
    %p182 = por %p180, %p181
    %p183 = scmp.ne.s32.totalorder %s175, %s178
    %p184 = scmp.eq.s32.totalorder %s13, 0
    %p185 = por %p183, %p184
    %p186 = scmp.ne.s32.totalorder %s175, %s178
    %p187 = scmp.eq.s32.totalorder %s18, 1
    %p188 = por %p186, %p187
    %p189 = scmp.ne.s32.totalorder %s178, %s179
    %p190 = scmp.eq.s32.totalorder %s18, 0
    %p191 = por %p189, %p190
    %p192 = scmp.ne.s32.totalorder %s178, %s179
    %p193 = scmp.eq.s32.totalorder %s19, 1
    %p194 = por %p192, %p193
    %p196 = scmp.ne.s32.totalorder %s179, %s195
    %p197 = scmp.eq.s32.totalorder %s19, 0
    %p198 = por %p196, %p197
    %p199 = scmp.le.s32.totalorder 1, %s13
    %p200 = scmp.lt.s32.totalorder %s13, 3
    %p201 = pnand %p199, %p200
    %p202 = pneg %p201
    // Predicated region
    $region9: #{tpu_custom_call.1} parent=5 // pred_check
      _
    $region10: #{tpu_custom_call.1} parent=5 // pred_check_branch
      %204 = sbr.rel (%p201) target = $region12
    $region11: #{tpu_custom_call.1} parent=5 // pred_region
      %s205 = ssub.s32 %s13, 1
      // Predicated region
      $region13: #{tpu_custom_call.1} parent=11 // pred_check
        %p206 = pneg %p60
      $region14: #{tpu_custom_call.1} parent=11 // pred_check_branch
        %208 = sbr.rel (%p206) target = $region16
      $region15: #{tpu_custom_call.1} parent=11 // pred_region
        _
      $region16: #{tpu_custom_call.1} parent=11 // pred_fallthru
        _
      // Predicated region
      $region17: #{tpu_custom_call.1} parent=11 // pred_check
        %p209 = pneg %p81
      $region18: #{tpu_custom_call.1} parent=11 // pred_check_branch
        %211 = sbr.rel (%p209) target = $region20
      $region19: #{tpu_custom_call.1} parent=11 // pred_region
        _
      $region20: #{tpu_custom_call.1} parent=11 // pred_fallthru
        _
      // Predicated region
      $region21: #{tpu_custom_call.1} parent=11 // pred_check
        %p212 = pneg %p102
      $region22: #{tpu_custom_call.1} parent=11 // pred_check_branch
        %214 = sbr.rel (%p212) target = $region24
      $region23: #{tpu_custom_call.1} parent=11 // pred_region
        _
      $region24: #{tpu_custom_call.1} parent=11 // pred_fallthru
        _
      // Predicated region
      $region25: #{tpu_custom_call.1} parent=11 // pred_check
        %p215 = pneg %p123
      $region26: #{tpu_custom_call.1} parent=11 // pred_check_branch
        %217 = sbr.rel (%p215) target = $region28
      $region27: #{tpu_custom_call.1} parent=11 // pred_region
        _
      $region28: #{tpu_custom_call.1} parent=11 // pred_fallthru
        _
      // Predicated region
      $region29: #{tpu_custom_call.1} parent=11 // pred_check
        %p218 = pneg %p144
      $region30: #{tpu_custom_call.1} parent=11 // pred_check_branch
        %220 = sbr.rel (%p218) target = $region32
      $region31: #{tpu_custom_call.1} parent=11 // pred_region
        _
      $region32: #{tpu_custom_call.1} parent=11 // pred_fallthru
        _
      // Predicated region
      $region33: #{tpu_custom_call.1} parent=11 // pred_check
        %p221 = pneg %p165
      $region34: #{tpu_custom_call.1} parent=11 // pred_check_branch
        %223 = sbr.rel (%p221) target = $region36
      $region35: #{tpu_custom_call.1} parent=11 // pred_region
        _
      $region36: #{tpu_custom_call.1} parent=11 // pred_fallthru
        _
    $region12: #{tpu_custom_call.1} parent=5 // pred_fallthru
      _
    %p224 = scmp.lt.s32.totalorder %s13, 2
    // Predicated region
    $region37: #{tpu_custom_call.1} parent=5 // pred_check
      %p225 = pneg %p224
    $region38: #{tpu_custom_call.1} parent=5 // pred_check_branch
      %227 = sbr.rel (%p225) target = $region40
    $region39: #{tpu_custom_call.1} parent=5 // pred_region
      // Predicated region
      $region41: #{tpu_custom_call.1} parent=39 // pred_check
        %p228 = pneg %p33
      $region42: #{tpu_custom_call.1} parent=39 // pred_check_branch
        %230 = sbr.rel (%p228) target = $region44
      $region43: #{tpu_custom_call.1} parent=39 // pred_region
        %p231 = scmp.lt.s32.totalorder %s13, 1
        %s232 = scalar_select %p231, %s13, 1
        %s233 = smul.addr %s232, 2
        %s234 = smul.addr %s233, 4
        %s235 = scalar_lea.vmem %s0, %s234
      $region44: #{tpu_custom_call.1} parent=39 // pred_fallthru
        _
    $region40: #{tpu_custom_call.1} parent=5 // pred_fallthru
      _
    %p236 = scmp.le.s32.totalorder 1, %s13
    %p237 = scmp.lt.s32.totalorder %s13, 3
    %p238 = pnand %p236, %p237
    %p239 = pneg %p238
    // Predicated region
    $region45: #{tpu_custom_call.1} parent=5 // pred_check
      _
    $region46: #{tpu_custom_call.1} parent=5 // pred_check_branch
      %241 = sbr.rel (%p238) target = $region48
    $region47: #{tpu_custom_call.1} parent=5 // pred_region
      %s242 = ssub.s32 %s13, 1
      %p243 = scmp.lt.s32.totalorder %s18, 1
      %s244 = scalar_select %p243, %s18, 1
      %s245 = smul.addr %s244, 2
      %s246 = smul.addr %s245, 4
      %s247 = scalar_lea.vmem %s0, %s246
      %p248 = pneg %p39
      %p249 = pneg %p36
      %p250 = pneg %p60
      %p251 = pneg %p57
      %p252 = pneg %p81
      %p253 = pneg %p78
      %p254 = pneg %p102
      %p255 = pneg %p99
      %p256 = pneg %p123
      %p257 = pneg %p120
      %p258 = pneg %p144
      %p259 = pneg %p141
      %p260 = pneg %p165
      %p261 = pneg %p162
      %p262 = pneg %p191
      %p263 = pneg %p188
      %p264 = scmp.lt.s32.totalorder %s18, 1
      %s265 = scalar_select %p264, %s18, 1
      %s266 = smul.addr %s265, 8
      %s267 = scalar_lea.vmem %s7, %s266
      %p268 = scmp.lt.s32.totalorder %s18, 1
      %s269 = scalar_select %p268, %s18, 1
      %s270 = smul.addr %s269, 2
      %s271 = smul.addr %s270, 4
      %s272 = scalar_lea.vmem %s0, %s271
      %p273 = scmp.lt.s32.totalorder %s18, 1
      %s274 = scalar_select %p273, %s18, 1
      %s275 = smul.addr %s274, 8
      %s276 = scalar_lea.vmem %s7, %s275
      %v278 = vld [vmem:[%s272] sm:$0xff]
      %v279 = vld [vmem:[%s1] sm:$0xf]
      %v280 = vld [vmem:[%s1 + $0x4] sm:$0xf]
      %v281 = vld [vmem:[%s1 + $0x8] sm:$0xf]
      %v282 = vld [vmem:[%s1 + $0xc] sm:$0xf]
      %v283 = vld [vmem:[%s1 + $0x10] sm:$0xf]
      %v284 = vld [vmem:[%s1 + $0x14] sm:$0xf]
      %v285 = vld [vmem:[%s1 + $0x18] sm:$0xf]
      %v286 = vld [vmem:[%s1 + $0x1c] sm:$0xf]
      %v287 = vld [vmem:[%s1 + $0x20] sm:$0xf]
      %v288 = vld [vmem:[%s1 + $0x24] sm:$0xf]
      %v289 = vld [vmem:[%s1 + $0x28] sm:$0xf]
      %v290 = vld [vmem:[%s1 + $0x2c] sm:$0xf]
      %v291 = vld [vmem:[%s1 + $0x30] sm:$0xf]
      %v292 = vld [vmem:[%s1 + $0x34] sm:$0xf]
      %v293 = vld [vmem:[%s1 + $0x38] sm:$0xf]
      %v294 = vld [vmem:[%s1 + $0x3c] sm:$0xf]
      %v295 = vld [vmem:[%s1 + $0x40] sm:$0xf]
      %v296 = vld [vmem:[%s1 + $0x44] sm:$0xf]
      %v297 = vld [vmem:[%s1 + $0x48] sm:$0xf]
      %v298 = vld [vmem:[%s1 + $0x4c] sm:$0xf]
      %v299 = vld [vmem:[%s1 + $0x50] sm:$0xf]
      %v300 = vld [vmem:[%s1 + $0x54] sm:$0xf]
      %v301 = vld [vmem:[%s1 + $0x58] sm:$0xf]
      %v302 = vld [vmem:[%s1 + $0x5c] sm:$0xf]
      %v303 = vld [vmem:[%s1 + $0x60] sm:$0xf]
      %v304 = vld [vmem:[%s1 + $0x64] sm:$0xf]
      %v305 = vld [vmem:[%s1 + $0x68] sm:$0xf]
      %v306 = vld [vmem:[%s1 + $0x6c] sm:$0xf]
      %v307 = vld [vmem:[%s1 + $0x70] sm:$0xf]
      %v308 = vld [vmem:[%s1 + $0x74] sm:$0xf]
      %v309 = vld [vmem:[%s2] sm:$0x1]
      %v311 = vlaneseq
      %v312 = vshrl.u32 %v311, 7
      %v313 = vsub.s32 0, %v312
      %v314 = vrot.slane %v309, %v313
      %v317 = vunpack.c.l.b16 %v278
      %v318 = vunpack.c.h.b16 %v278
      %v319 = vpack.c.b16 %v317, %v317
      %v320 = vpack.c.b16 %v318, %v318
      %v352 = vunpack.c.l.b16 %v279
      %v353 = vunpack.c.l.b16 %v280
      %v354 = vunpack.c.l.b16 %v281
      %v355 = vunpack.c.l.b16 %v282
      %v356 = vunpack.c.l.b16 %v283
      %v357 = vunpack.c.l.b16 %v284
      %v358 = vunpack.c.l.b16 %v285
      %v359 = vunpack.c.l.b16 %v286
      %v360 = vunpack.c.l.b16 %v287
      %v361 = vunpack.c.l.b16 %v288
      %v362 = vunpack.c.l.b16 %v289
      %v363 = vunpack.c.l.b16 %v290
      %v364 = vunpack.c.l.b16 %v291
      %v365 = vunpack.c.l.b16 %v292
      %v366 = vunpack.c.l.b16 %v293
      %v367 = vunpack.c.l.b16 %v294
      %v368 = vunpack.c.l.b16 %v295
      %v369 = vunpack.c.l.b16 %v296
      %v370 = vunpack.c.l.b16 %v297
      %v371 = vunpack.c.l.b16 %v298
      %v372 = vunpack.c.l.b16 %v299
      %v373 = vunpack.c.l.b16 %v300
      %v374 = vunpack.c.l.b16 %v301
      %v375 = vunpack.c.l.b16 %v302
      %v376 = vunpack.c.l.b16 %v303
      %v377 = vunpack.c.l.b16 %v304
      %v378 = vunpack.c.l.b16 %v305
      %v379 = vunpack.c.l.b16 %v306
      %v380 = vunpack.c.l.b16 %v307
      %v381 = vunpack.c.l.b16 %v308
      %v382 = vpack.c.b16 %v353, %v352
      %v383 = vpack.c.b16 %v355, %v354
      %v384 = vpack.c.b16 %v357, %v356
      %v385 = vpack.c.b16 %v359, %v358
      %v386 = vpack.c.b16 %v361, %v360
      %v387 = vpack.c.b16 %v363, %v362
      %v388 = vpack.c.b16 %v365, %v364
      %v389 = vpack.c.b16 %v367, %v366
      %v390 = vpack.c.b16 %v369, %v368
      %v391 = vpack.c.b16 %v371, %v370
      %v392 = vpack.c.b16 %v373, %v372
      %v393 = vpack.c.b16 %v375, %v374
      %v394 = vpack.c.b16 %v377, %v376
      %v395 = vpack.c.b16 %v379, %v378
      %v396 = vpack.c.b16 %v381, %v380
      %vm412 = vcmask 916480
      %v414 = vsel %vm412, %v320, 0
      %416 = vmatprep.subr.bf16.mxu0 0
      %417 = vmatpush1.bf16.msra.mxu0 %v382
      %418 = vmatprep.subr.bf16.mxu0 0
      %419 = vmatpush1.bf16.msra.mxu0 %v383
      %420 = vmatprep.subr.bf16.mxu0 0
      %421 = vmatpush1.bf16.msra.mxu0 %v384
      %422 = vmatprep.subr.bf16.mxu0 0
      %423 = vmatpush1.bf16.msra.mxu0 %v385
      %424 = vmatprep.subr.bf16.mxu0 0
      %425 = vmatpush1.bf16.msra.mxu0 %v386
      %426 = vmatprep.subr.bf16.mxu0 0
      %427 = vmatpush1.bf16.msra.mxu0 %v387
      %428 = vmatprep.subr.bf16.mxu0 0
      %429 = vmatpush1.bf16.msra.mxu0 %v388
      %430 = vmatprep.subr.bf16.mxu0 0
      %431 = vmatpush1.bf16.msra.mxu0 %v389
      %432 = vmatprep.subr.bf16.mxu0 0
      %433 = vmatpush1.bf16.msra.mxu0 %v390
      %434 = vmatprep.subr.bf16.mxu0 0
      %435 = vmatpush1.bf16.msra.mxu0 %v391
      %436 = vmatprep.subr.bf16.mxu0 0
      %437 = vmatpush1.bf16.msra.mxu0 %v392
      %438 = vmatprep.subr.bf16.mxu0 0
      %439 = vmatpush1.bf16.msra.mxu0 %v393
      %440 = vmatprep.subr.bf16.mxu0 0
      %441 = vmatpush1.bf16.msra.mxu0 %v394
      %442 = vmatprep.subr.bf16.mxu0 0
      %443 = vmatpush1.bf16.msra.mxu0 %v395
      %444 = vmatprep.subr.bf16.mxu0 0
      %445 = vmatpush1.bf16.msra.mxu0 %v396
      %446 = vmatprep.subr.bf16.mxu0 0
      %447 = vmatpush1.bf16.msra.mxu0 0
      %448 = vmatprep.mubr.bf16.mxu0 %v414
      %449 = vmatmul.mubr.bf16.gmra.mrb[0].mxu0 %v319
      %v450 = vpop.f32.mrb[0].mxu0
      %v451 = vadd.f32 %v314, %v450
      %v452 = vpop.f32.mrb[0].mxu0
      %v453 = vpop.f32.mrb[0].mxu0
      %v454 = vpop.f32.mrb[0].mxu0
      %455 = vdwg.mxu0
      %v456 = vsub.f32 0.0, %v451
      %v457 = vmul.f32 %v456, 1.442695
      %v458 = vpow.pop %v457
      %v459 = vadd.f32 %v458, 1.0
      %v460 = vrcp.pop %v459
      %v461 = vpack.c.bf16 %v460, %v460
      %v462 = vld [vmem:[%s3] sm:$0xf]
      %v463 = vld [vmem:[%s3 + $0x4] sm:$0xf]
      %v464 = vld [vmem:[%s3 + $0x8] sm:$0xf]
      %v465 = vld [vmem:[%s3 + $0xc] sm:$0xf]
      %v466 = vld [vmem:[%s3 + $0x10] sm:$0xf]
      %v467 = vld [vmem:[%s3 + $0x14] sm:$0xf]
      %v468 = vld [vmem:[%s3 + $0x18] sm:$0xf]
      %v469 = vld [vmem:[%s3 + $0x1c] sm:$0xf]
      %v470 = vld [vmem:[%s3 + $0x20] sm:$0xf]
      %v471 = vld [vmem:[%s3 + $0x24] sm:$0xf]
      %v472 = vld [vmem:[%s3 + $0x28] sm:$0xf]
      %v473 = vld [vmem:[%s3 + $0x2c] sm:$0xf]
      %v474 = vld [vmem:[%s3 + $0x30] sm:$0xf]
      %v475 = vld [vmem:[%s4] sm:$0x1]
      %v477 = vlaneseq
      %v478 = vshrl.u32 %v477, 7
      %v479 = vsub.s32 0, %v478
      %v480 = vrot.slane %v475, %v479
      %v495 = vunpack.c.l.b16 %v462
      %v496 = vunpack.c.l.b16 %v463
      %v497 = vunpack.c.l.b16 %v464
      %v498 = vunpack.c.l.b16 %v465
      %v499 = vunpack.c.l.b16 %v466
      %v500 = vunpack.c.l.b16 %v467
      %v501 = vunpack.c.l.b16 %v468
      %v502 = vunpack.c.l.b16 %v469
      %v503 = vunpack.c.l.b16 %v470
      %v504 = vunpack.c.l.b16 %v471
      %v505 = vunpack.c.l.b16 %v472
      %v506 = vunpack.c.l.b16 %v473
      %v507 = vunpack.c.l.b16 %v474
      %v508 = vpack.c.b16 %v496, %v495
      %v509 = vpack.c.b16 %v498, %v497
      %v510 = vpack.c.b16 %v500, %v499
      %v511 = vpack.c.b16 %v502, %v501
      %v512 = vpack.c.b16 %v504, %v503
      %v513 = vpack.c.b16 %v506, %v505
      %v514 = vpack.c.b16 %v507, %v507
      %vm521 = vcmask 850944
      %v523 = vsel %vm521, %v461, 0
      %vm525 = vcmask 1043456
      %v527 = vsel %vm525, %v514, 0
      %529 = vmatprep.subr.bf16.mxu0 0
      %530 = vmatpush1.bf16.msra.mxu0 %v508
      %531 = vmatprep.subr.bf16.mxu0 0
      %532 = vmatpush1.bf16.msra.mxu0 %v509
      %533 = vmatprep.subr.bf16.mxu0 0
      %534 = vmatpush1.bf16.msra.mxu0 %v510
      %535 = vmatprep.subr.bf16.mxu0 0
      %536 = vmatpush1.bf16.msra.mxu0 %v511
      %537 = vmatprep.subr.bf16.mxu0 0
      %538 = vmatpush1.bf16.msra.mxu0 %v512
      %539 = vmatprep.subr.bf16.mxu0 0
      %540 = vmatpush1.bf16.msra.mxu0 %v513
      %541 = vmatprep.subr.bf16.mxu0 0
      %542 = vmatpush1.bf16.msra.mxu0 %v527
      %543 = vmatprep.subr.bf16.mxu0 0
      %544 = vmatpush1.bf16.msra.mxu0 0
      %545 = vmatprep.subr.bf16.mxu0 0
      %546 = vmatpush1.bf16.msra.mxu0 0
      %547 = vmatprep.subr.bf16.mxu0 0
      %548 = vmatpush1.bf16.msra.mxu0 0
      %549 = vmatprep.subr.bf16.mxu0 0
      %550 = vmatpush1.bf16.msra.mxu0 0
      %551 = vmatprep.subr.bf16.mxu0 0
      %552 = vmatpush1.bf16.msra.mxu0 0
      %553 = vmatprep.subr.bf16.mxu0 0
      %554 = vmatpush1.bf16.msra.mxu0 0
      %555 = vmatprep.subr.bf16.mxu0 0
      %556 = vmatpush1.bf16.msra.mxu0 0
      %557 = vmatprep.subr.bf16.mxu0 0
      %558 = vmatpush1.bf16.msra.mxu0 0
      %559 = vmatprep.subr.bf16.mxu0 0
      %560 = vmatpush1.bf16.msra.mxu0 0
      %561 = vmatprep.mubr.bf16.mxu0 0
      %562 = vmatmul.mubr.bf16.gmra.mrb[0].mxu0 %v523
      %v563 = vpop.f32.mrb[0].mxu0
      %v564 = vadd.f32 %v480, %v563
      %v565 = vpop.f32.mrb[0].mxu0
      %v566 = vpop.f32.mrb[0].mxu0
      %v567 = vpop.f32.mrb[0].mxu0
      %568 = vdwg.mxu0
      %v569 = vsub.f32 0.0, %v564
      %v570 = vmul.f32 %v569, 1.442695
      %v571 = vpow.pop %v570
      %v572 = vadd.f32 %v571, 1.0
      %v573 = vrcp.pop %v572
      %v574 = vpack.c.bf16 %v573, %v573
      %v575 = vld [vmem:[%s5] sm:$0xf]
      %v576 = vld [vmem:[%s5 + $0x4] sm:$0xf]
      %v577 = vld [vmem:[%s5 + $0x8] sm:$0xf]
      %v578 = vld [vmem:[%s5 + $0xc] sm:$0x3]
      %v579 = vld [vmem:[%s6] sm:$0x1]
      %v581 = vlaneseq
      %v582 = vshrl.u32 %v581, 7
      %v583 = vsub.s32 0, %v582
      %v584 = vrot.slane %v579, %v583
      %v590 = vunpack.c.l.b16 %v575
      %v591 = vunpack.c.l.b16 %v576
      %v592 = vunpack.c.l.b16 %v577
      %v593 = vunpack.c.l.b16 %v578
      %v594 = vpack.c.b16 %v591, %v590
      %v595 = vpack.c.b16 %v593, %v592
      %vm597 = vcmask 220160
      %v599 = vsel %vm597, %v574, 0
      %vm601 = vcmask 1044480
      %vm602 = vcmask 1045504
      %v603 = vsel %vm601, 4294967295, 65535
      %v604 = vsel %vm602, %v603, 0
      %v606 = vand.u32 %v595, %v604
      %608 = vmatprep.subr.bf16.mxu0 0
      %609 = vmatpush1.bf16.msra.mxu0 %v594
      %610 = vmatprep.subr.bf16.mxu0 0
      %611 = vmatpush1.bf16.msra.mxu0 %v606
      %612 = vmatprep.subr.bf16.mxu0 0
      %613 = vmatpush1.bf16.msra.mxu0 0
      %614 = vmatprep.subr.bf16.mxu0 0
      %615 = vmatpush1.bf16.msra.mxu0 0
      %616 = vmatprep.subr.bf16.mxu0 0
      %617 = vmatpush1.bf16.msra.mxu0 0
      %618 = vmatprep.subr.bf16.mxu0 0
      %619 = vmatpush1.bf16.msra.mxu0 0
      %620 = vmatprep.subr.bf16.mxu0 0
      %621 = vmatpush1.bf16.msra.mxu0 0
      %622 = vmatprep.subr.bf16.mxu0 0
      %623 = vmatpush1.bf16.msra.mxu0 0
      %624 = vmatprep.subr.bf16.mxu0 0
      %625 = vmatpush1.bf16.msra.mxu0 0
      %626 = vmatprep.subr.bf16.mxu0 0
      %627 = vmatpush1.bf16.msra.mxu0 0
      %628 = vmatprep.subr.bf16.mxu0 0
      %629 = vmatpush1.bf16.msra.mxu0 0
      %630 = vmatprep.subr.bf16.mxu0 0
      %631 = vmatpush1.bf16.msra.mxu0 0
      %632 = vmatprep.subr.bf16.mxu0 0
      %633 = vmatpush1.bf16.msra.mxu0 0
      %634 = vmatprep.subr.bf16.mxu0 0
      %635 = vmatpush1.bf16.msra.mxu0 0
      %636 = vmatprep.subr.bf16.mxu0 0
      %637 = vmatpush1.bf16.msra.mxu0 0
      %638 = vmatprep.subr.bf16.mxu0 0
      %639 = vmatpush1.bf16.msra.mxu0 0
      %640 = vmatprep.mubr.bf16.mxu0 0
      %641 = vmatmul.mubr.bf16.gmra.mrb[0].mxu0 %v599
      %v642 = vpop.f32.mrb[0].mxu0
      %v643 = vadd.f32 %v584, %v642
      %v644 = vpop.f32.mrb[0].mxu0
      %v645 = vpop.f32.mrb[0].mxu0
      %v646 = vpop.f32.mrb[0].mxu0
      %647 = vdwg.mxu0
      %vm648 = vcmask 23552
      %649 = vst.msk [vmem:[%s276] sm:$0xff] %vm648, %v643
      %p650 = scmp.lt.s32.totalorder %s18, 1
      %s651 = scalar_select %p650, %s18, 1
      %s652 = smul.addr %s651, 8
      %s653 = scalar_lea.vmem %s7, %s652
      // Predicated region
      $region49: #{tpu_custom_call.1} parent=47 // pred_check
        %p654 = pneg %p188
      $region50: #{tpu_custom_call.1} parent=47 // pred_check_branch
        %656 = sbr.rel (%p654) target = $region52
      $region51: #{tpu_custom_call.1} parent=47 // pred_region
        _
      $region52: #{tpu_custom_call.1} parent=47 // pred_fallthru
        _
    $region48: #{tpu_custom_call.1} parent=5 // pred_fallthru
      _
    %p657 = scmp.le.s32.totalorder 2, %s13
    // Predicated region
    $region53: #{tpu_custom_call.1} parent=5 // pred_check
      %p658 = pneg %p657
    $region54: #{tpu_custom_call.1} parent=5 // pred_check_branch
      %660 = sbr.rel (%p658) target = $region56
    $region55: #{tpu_custom_call.1} parent=5 // pred_region
      %s661 = ssub.s32 %s13, 2
      // Predicated region
      $region57: #{tpu_custom_call.1} parent=55 // pred_check
        %p662 = pneg %p194
      $region58: #{tpu_custom_call.1} parent=55 // pred_check_branch
        %664 = sbr.rel (%p662) target = $region60
      $region59: #{tpu_custom_call.1} parent=55 // pred_region
        %p665 = scmp.lt.s32.totalorder %s19, 1
        %s666 = scalar_select %p665, %s19, 1
        %s667 = smul.addr %s666, 8
        %s668 = scalar_lea.vmem %s7, %s667
      $region60: #{tpu_custom_call.1} parent=55 // pred_fallthru
        _
    $region56: #{tpu_custom_call.1} parent=5 // pred_fallthru
      _
  $region6: #{tpu_custom_call.1} parent=0 // loop_footer
    %s17 = sadd.s32 1, %s13
  $region7: #{tpu_custom_call.1} parent=0 // loop_footer_branch
    %12 = sbr.rel target = $region3
  $region8: #{tpu_custom_call.1} parent=0 // loop_exit
    _

</llo_original>
